<compile_context>
chip_gen: v7x
topology: tpu7x:2x2x1
jax: 0.10.0
libtpu: 0.0.40
codegen_flags: <defaults>
</compile_context>

<pallas_src>
import jax
import jax.numpy as jnp
from jax.experimental import pallas as pl
from jax.experimental.pallas import tpu as pltpu

LANE = 128     # TPU lane width — hidden/action dims padded to this
SUBLANE = 8    # sublane granularity for the batch tile
HIDDEN = 24    # hidden width of the original PyTorch DQN


def dqn_kernel(x_ref, w1_ref, b1_ref, w2_ref, b2_ref, w3_ref, b3_ref, out_ref):
    """One batch tile of the 3-layer MLP. x is (TB, S); everything else lane-dense."""
    x = x_ref[...]                                                       # (TB, S)
    h1 = jnp.dot(x, w1_ref[...], preferred_element_type=jnp.float32) + b1_ref[...]
    h1 = jnp.maximum(h1, 0.0)                                            # (TB, 128)
    h2 = jnp.dot(h1, w2_ref[...], preferred_element_type=jnp.float32) + b2_ref[...]
    h2 = jnp.maximum(h2, 0.0)                                            # (TB, 128)
    out = jnp.dot(h2, w3_ref[...], preferred_element_type=jnp.float32) + b3_ref[...]
    out_ref[...] = out.astype(out_ref.dtype)                             # (TB, 128) lane-dense store


def _round_up(n, m):
    return (n + m - 1) // m * m


def _pad2d(a, rows, cols):
    return jnp.pad(a, ((0, rows - a.shape[0]), (0, cols - a.shape[1])))


def prepare_params(params):
    """Pad weights/biases to lane-dense layout ONCE (host-side, hoisted out of the forward)."""
    w1, b1, w2, b2, w3, b3 = params
    S = w1.shape[0]
    A = w3.shape[1]
    HP = _round_up(HIDDEN, LANE)
    AP = _round_up(max(A, 1), LANE)
    as2d = lambda b: jnp.reshape(jnp.asarray(b, jnp.float32), (1, -1))   # handles 1-D PyTorch biases

    w1p = _pad2d(jnp.asarray(w1, jnp.float32), S, HP)   # first dim stays S — no lane pad of x needed
    b1p = _pad2d(as2d(b1), 1, HP)
    w2p = _pad2d(jnp.asarray(w2, jnp.float32), HP, HP)
    b2p = _pad2d(as2d(b2), 1, HP)
    w3p = _pad2d(jnp.asarray(w3, jnp.float32), HP, AP)
    b3p = _pad2d(as2d(b3), 1, AP)
    return {"padded": (w1p, b1p, w2p, b2p, w3p, b3p),
            "state_size": S, "action_size": A}


def dqn_forward(x, prepared, *, tb=1024, single_step_rows=2048):
    """Pallas forward pass. x: (B, state_size) f32. Returns (B, action_size) f32."""
    w1p, b1p, w2p, b2p, w3p, b3p = prepared["padded"]
    A = prepared["action_size"]
    B, S = x.shape
    assert S == prepared["state_size"], (S, prepared["state_size"])
    HP = w2p.shape[0]
    AP = w3p.shape[1]

    BP = _round_up(max(B, 1), SUBLANE)
    if BP <= single_step_rows:
        # Single grid step: whole (padded) batch in one invocation, no pipeline churn.
        TB = BP
    else:
        # Large batch: 512-1024-row tiles, >= 2 steps so v7x can use both TensorCores.
        TB = _round_up(min(tb, single_step_rows), SUBLANE)
        BP = _round_up(B, TB)

    xp = jnp.pad(x.astype(jnp.float32), ((0, BP - B), (0, 0)))   # pad batch dim only

    const = lambda i: (0, 0)   # weights/biases: same block every step -> VMEM-resident

    out = pl.pallas_call(
        dqn_kernel,
        out_shape=jax.ShapeDtypeStruct((BP, AP), jnp.float32),
        grid_spec=pltpu.PrefetchScalarGridSpec(
            num_scalar_prefetch=0,
            grid=(BP // TB,),
            in_specs=[
                pl.BlockSpec((TB, S), lambda i: (i, 0)),   # x tile; last dim == full S (4)
                pl.BlockSpec((S, HP), const),              # W1 (first dim == full S)
                pl.BlockSpec((1, HP), const),              # b1
                pl.BlockSpec((HP, HP), const),             # W2
                pl.BlockSpec((1, HP), const),              # b2
                pl.BlockSpec((HP, AP), const),             # W3
                pl.BlockSpec((1, AP), const),              # b3
            ],
            out_specs=pl.BlockSpec((TB, AP), lambda i: (i, 0)),
        ),
        compiler_params=pltpu.CompilerParams(
            dimension_semantics=("parallel",),             # v7x: shard batch over 2 TCs
        ),
    )(xp, w1p, b1p, w2p, b2p, w3p, b3p)

    return out[:B, :A]


def dqn_reference(x, params):
    """Plain-JAX reference of the same forward pass (correctness check / tiny-batch path)."""
    w1, b1, w2, b2, w3, b3 = params
    h1 = jnp.maximum(x @ w1 + b1, 0.0)
    h2 = jnp.maximum(h1 @ w2 + b2, 0.0)
    return h2 @ w3 + b3


def dqn_apply(x, raw_params, prepared, *, small_batch_threshold=8, **kwargs):
    """Dispatcher: tiny acting batches (B <= 8) go to plain XLA (pure launch overhead otherwise)."""
    if x.shape[0] <= small_batch_threshold:
        return dqn_reference(x, raw_params)
    return dqn_forward(x, prepared, **kwargs)


def init_params(key, state_size, action_size):
    """Deterministic init mimicking PyTorch Linear default (uniform +/- 1/sqrt(fan_in))."""
    def linear(k, fan_in, fan_out):
        kw, kb = jax.random.split(k)
        bound = 1.0 / jnp.sqrt(jnp.float32(fan_in))
        w = jax.random.uniform(kw, (fan_in, fan_out), jnp.float32, -bound, bound)
        b = jax.random.uniform(kb, (1, fan_out), jnp.float32, -bound, bound)
        return w, b

    k1, k2, k3 = jax.random.split(key, 3)
    w1, b1 = linear(k1, state_size, HIDDEN)
    w2, b2 = linear(k2, HIDDEN, HIDDEN)
    w3, b3 = linear(k3, HIDDEN, action_size)
    return (w1, b1, w2, b2, w3, b3)


if __name__ == "__main__":
    # CartPole-like sizes: state_size=4, action_size=2.
    state_size, action_size = 4, 2

    key = jax.random.PRNGKey(0)
    key_params, key_x1, key_x2, key_x3 = jax.random.split(key, 4)
    params = init_params(key_params, state_size, action_size)
    prepared = prepare_params(params)          # padded once, reused across calls

    # 1) Replay-style batch -> single grid step (TB = padded batch).
    x1 = jax.random.normal(key_x1, (32, state_size), jnp.float32)
    out1 = jax.block_until_ready(dqn_forward(x1, prepared))
    ref1 = dqn_reference(x1, params)
    assert out1.shape == (32, action_size), out1.shape
    assert jnp.allclose(out1, ref1, atol=1e-5, rtol=1e-4), "mismatch (single-step batch)"

    # 2) Forced multi-step grid (correctness test of the tiled / batch-padding path).
    x2 = jax.random.normal(key_x2, (200, state_size), jnp.float32)
    out2 = jax.block_until_ready(dqn_forward(x2, prepared, tb=64, single_step_rows=64))
    ref2 = dqn_reference(x2, params)
    assert out2.shape == (200, action_size), out2.shape
    assert jnp.allclose(out2, ref2, atol=1e-5, rtol=1e-4), "mismatch (gridded batch)"

    # 3) Tiny acting batch -> XLA fallback via the dispatcher (no Pallas launch overhead).
    x3 = jax.random.normal(key_x3, (4, state_size), jnp.float32)
    out3 = jax.block_until_ready(dqn_apply(x3, params, prepared))
    assert out3.shape == (4, action_size), out3.shape
    assert jnp.allclose(out3, dqn_reference(x3, params), atol=1e-5, rtol=1e-4), "mismatch (tiny batch)"

    # TODO(synk): training loop / replay buffer / optimizer from the original script are
    # out of scope for a forward-pass kernel and are not implemented here.
    print("KERNEL_OK")
</pallas_src>

<mosaic_0001>
module attributes {stable_mosaic.version = 11 : i64} {
  func.func @dqn_kernel(%arg0: i32, %arg1: memref<32x4xf32, #tpu.memory_space<vmem>>, %arg2: memref<4x128xf32, #tpu.memory_space<vmem>>, %arg3: memref<1x128xf32, #tpu.memory_space<vmem>>, %arg4: memref<128x128xf32, #tpu.memory_space<vmem>>, %arg5: memref<1x128xf32, #tpu.memory_space<vmem>>, %arg6: memref<128x128xf32, #tpu.memory_space<vmem>>, %arg7: memref<1x128xf32, #tpu.memory_space<vmem>>, %arg8: memref<32x128xf32, #tpu.memory_space<vmem>>) attributes {dimension_semantics = [#tpu.dimension_semantics<parallel>], iteration_bounds = array<i64: 1>, scalar_prefetch = 0 : i64, scratch_operands = 0 : i64, tpu.core_type = #tpu.core_type<tc>, window_params = [{transform_indices = @transform_0, window_bounds = array<i64: 32, 4>}, {pipeline_mode = #tpu.pipeline_mode<synchronous>, transform_indices = @transform_1, window_bounds = array<i64: 4, 128>}, {pipeline_mode = #tpu.pipeline_mode<synchronous>, transform_indices = @transform_2, window_bounds = array<i64: 1, 128>}, {pipeline_mode = #tpu.pipeline_mode<synchronous>, transform_indices = @transform_3, window_bounds = array<i64: 128, 128>}, {pipeline_mode = #tpu.pipeline_mode<synchronous>, transform_indices = @transform_4, window_bounds = array<i64: 1, 128>}, {pipeline_mode = #tpu.pipeline_mode<synchronous>, transform_indices = @transform_5, window_bounds = array<i64: 128, 128>}, {pipeline_mode = #tpu.pipeline_mode<synchronous>, transform_indices = @transform_6, window_bounds = array<i64: 1, 128>}, {transform_indices = @transform_7, window_bounds = array<i64: 32, 128>}]} {
    %c0 = arith.constant 0 : index
    %c0_0 = arith.constant 0 : index
    %0 = vector.load %arg1[%c0, %c0_0] : memref<32x4xf32, #tpu.memory_space<vmem>>, vector<32x4xf32>
    %c0_1 = arith.constant 0 : index
    %c0_2 = arith.constant 0 : index
    %1 = vector.load %arg2[%c0_1, %c0_2] : memref<4x128xf32, #tpu.memory_space<vmem>>, vector<4x128xf32>
    %cst = arith.constant dense<0.000000e+00> : vector<32x128xf32>
    %2 = tpu.matmul %0, %1, %cst {dimension_numbers = #tpu.dot_dimension_numbers<[1], [0], [0], [1], [0, 0, 1, 1], [], []>} : vector<32x4xf32>, vector<4x128xf32>, vector<32x128xf32> -> vector<32x128xf32>
    %c0_3 = arith.constant 0 : index
    %c0_4 = arith.constant 0 : index
    %3 = vector.load %arg3[%c0_3, %c0_4] : memref<1x128xf32, #tpu.memory_space<vmem>>, vector<1x128xf32>
    %4 = vector.broadcast %3 : vector<1x128xf32> to vector<32x128xf32>
    %5 = arith.addf %2, %4 : vector<32x128xf32>
    %cst_5 = arith.constant 0.000000e+00 : f32
    %6 = vector.broadcast %cst_5 : f32 to vector<32x128xf32>
    %7 = arith.maximumf %5, %6 : vector<32x128xf32>
    %c0_6 = arith.constant 0 : index
    %c0_7 = arith.constant 0 : index
    %8 = vector.load %arg4[%c0_6, %c0_7] : memref<128x128xf32, #tpu.memory_space<vmem>>, vector<128x128xf32>
    %cst_8 = arith.constant dense<0.000000e+00> : vector<32x128xf32>
    %9 = tpu.matmul %7, %8, %cst_8 {dimension_numbers = #tpu.dot_dimension_numbers<[1], [0], [0], [1], [0, 0, 1, 1], [], []>} : vector<32x128xf32>, vector<128x128xf32>, vector<32x128xf32> -> vector<32x128xf32>
    %c0_9 = arith.constant 0 : index
    %c0_10 = arith.constant 0 : index
    %10 = vector.load %arg5[%c0_9, %c0_10] : memref<1x128xf32, #tpu.memory_space<vmem>>, vector<1x128xf32>
    %11 = vector.broadcast %10 : vector<1x128xf32> to vector<32x128xf32>
    %12 = arith.addf %9, %11 : vector<32x128xf32>
    %cst_11 = arith.constant 0.000000e+00 : f32
    %13 = vector.broadcast %cst_11 : f32 to vector<32x128xf32>
    %14 = arith.maximumf %12, %13 : vector<32x128xf32>
    %c0_12 = arith.constant 0 : index
    %c0_13 = arith.constant 0 : index
    %15 = vector.load %arg6[%c0_12, %c0_13] : memref<128x128xf32, #tpu.memory_space<vmem>>, vector<128x128xf32>
    %cst_14 = arith.constant dense<0.000000e+00> : vector<32x128xf32>
    %16 = tpu.matmul %14, %15, %cst_14 {dimension_numbers = #tpu.dot_dimension_numbers<[1], [0], [0], [1], [0, 0, 1, 1], [], []>} : vector<32x128xf32>, vector<128x128xf32>, vector<32x128xf32> -> vector<32x128xf32>
    %c0_15 = arith.constant 0 : index
    %c0_16 = arith.constant 0 : index
    %17 = vector.load %arg7[%c0_15, %c0_16] : memref<1x128xf32, #tpu.memory_space<vmem>>, vector<1x128xf32>
    %18 = vector.broadcast %17 : vector<1x128xf32> to vector<32x128xf32>
    %19 = arith.addf %16, %18 : vector<32x128xf32>
    %c0_17 = arith.constant 0 : index
    %c0_18 = arith.constant 0 : index
    %20 = vector.load %arg8[%c0_17, %c0_18] : memref<32x128xf32, #tpu.memory_space<vmem>>, vector<32x128xf32>
    tpu.vector_store %arg8[%c0_17, %c0_18], %19 {strides = array<i32>} : memref<32x128xf32, #tpu.memory_space<vmem>>, vector<32x128xf32>,
    return
  }
  func.func @transform_0(%arg0: i32) -> (i32, i32) {
    %c0_i32 = arith.constant 0 : i32
    %c0_i32_0 = arith.constant 0 : i32
    return %arg0, %c0_i32 : i32, i32
  }
  func.func @transform_1(%arg0: i32) -> (i32, i32) {
    %c0_i32 = arith.constant 0 : i32
    %c0_i32_0 = arith.constant 0 : i32
    %c0_i32_1 = arith.constant 0 : i32
    return %c0_i32, %c0_i32_0 : i32, i32
  }
  func.func @transform_2(%arg0: i32) -> (i32, i32) {
    %c0_i32 = arith.constant 0 : i32
    %c0_i32_0 = arith.constant 0 : i32
    %c0_i32_1 = arith.constant 0 : i32
    return %c0_i32, %c0_i32_0 : i32, i32
  }
  func.func @transform_3(%arg0: i32) -> (i32, i32) {
    %c0_i32 = arith.constant 0 : i32
    %c0_i32_0 = arith.constant 0 : i32
    %c0_i32_1 = arith.constant 0 : i32
    return %c0_i32, %c0_i32_0 : i32, i32
  }
  func.func @transform_4(%arg0: i32) -> (i32, i32) {
    %c0_i32 = arith.constant 0 : i32
    %c0_i32_0 = arith.constant 0 : i32
    %c0_i32_1 = arith.constant 0 : i32
    return %c0_i32, %c0_i32_0 : i32, i32
  }
  func.func @transform_5(%arg0: i32) -> (i32, i32) {
    %c0_i32 = arith.constant 0 : i32
    %c0_i32_0 = arith.constant 0 : i32
    %c0_i32_1 = arith.constant 0 : i32
    return %c0_i32, %c0_i32_0 : i32, i32
  }
  func.func @transform_6(%arg0: i32) -> (i32, i32) {
    %c0_i32 = arith.constant 0 : i32
    %c0_i32_0 = arith.constant 0 : i32
    %c0_i32_1 = arith.constant 0 : i32
    return %c0_i32, %c0_i32_0 : i32, i32
  }
  func.func @transform_7(%arg0: i32) -> (i32, i32) {
    %c0_i32 = arith.constant 0 : i32
    %c0_i32_0 = arith.constant 0 : i32
    return %arg0, %c0_i32 : i32, i32
  }
}

</mosaic_0001>

<llo_original>
// kernel: tpu_custom_call.1
$region0: #{tpu_custom_call.1}
  #allocation0 [shape = 'u32[]', space=smem, size = 0x4, offset = 0x4, fixed_abs, tag = 'smem constant byte address 0x4 - core index']
  #allocation1 [shape = 'u32[144,128]{1,0:T(1,128)}', space=vmem, size = 0x12000, scoped, tag = 'internal scratch']
  %s0 = inlined_call_operand.vmem [shape: f32[32,4], index: 0, kind: input, shape index: {}]
  %s1 = inlined_call_operand.vmem [shape: f32[4,128], index: 1, kind: input, shape index: {}]
  %s2 = inlined_call_operand.vmem [shape: f32[1,128], index: 2, kind: input, shape index: {}]
  %s3 = inlined_call_operand.hbm [shape: f32[128,128], index: 3, kind: input, shape index: {}]
  %s4 = inlined_call_operand.vmem [shape: f32[1,128], index: 4, kind: input, shape index: {}]
  %s5 = inlined_call_operand.hbm [shape: f32[128,128], index: 5, kind: input, shape index: {}]
  %s6 = inlined_call_operand.vmem [shape: f32[1,128], index: 6, kind: input, shape index: {}]
  %s7 = inlined_call_operand.hbm [shape: f32[32,128], index: 7, kind: output, shape index: {}]
  %s8 = sld [smem:[#allocation0]]
  $region46: #{tpu_custom_call.1} parent=0
    _
  %s10 = ssub.s32 1, %s8
  %s11 = scalar_select 0, %s10, %s8
  $region1: #{tpu_custom_call.1} parent=0
    #allocation2 [shape = 'u8[65536]{0}', space=vmem, size = 0x10000, scoped, tag = 'input window, operand 3, single buffered']
    #allocation3 [shape = 's32[1]{0}', space=sflag, size = 0x4, scoped, tag = 'scoped memory for tpu_custom_call.1']
    #allocation4 [shape = 's32[1]{0}', space=sflag, size = 0x4, scoped, tag = 'scoped memory for tpu_custom_call.1']
    #allocation5 [shape = 'u8[65536]{0}', space=vmem, size = 0x10000, scoped, tag = 'input window, operand 5, single buffered']
    #allocation6 [shape = 's32[1]{0}', space=sflag, size = 0x4, scoped, tag = 'scoped memory for tpu_custom_call.1']
    #allocation7 [shape = 'u8[16384]{0}', space=vmem, size = 0x4000, scoped, tag = 'output window, operand 0, single buffered']
    %12 = vsyncpa [#allocation3], 0
    %13 = vsyncpa [#allocation6], 0
    %14 = vsyncpa [#allocation4], 0
    // Predicated region
    $region2: #{tpu_custom_call.1} parent=1 // pred_check
      _
    $region3: #{tpu_custom_call.1} parent=1 // pred_check_branch
      %16 = sbr.rel (0) target = $region5
    $region4: #{tpu_custom_call.1} parent=1 // pred_region
      _
    $region5: #{tpu_custom_call.1} parent=1 // pred_fallthru
      _
    // Predicated region
    $region6: #{tpu_custom_call.1} parent=1 // pred_check
      _
    $region7: #{tpu_custom_call.1} parent=1 // pred_check_branch
      %18 = sbr.rel (0) target = $region9
    $region8: #{tpu_custom_call.1} parent=1 // pred_region
      _
    $region9: #{tpu_custom_call.1} parent=1 // pred_fallthru
      _
    // Predicated region
    $region10: #{tpu_custom_call.1} parent=1 // pred_check
      _
    $region11: #{tpu_custom_call.1} parent=1 // pred_check_branch
      %20 = sbr.rel (0) target = $region13
    $region12: #{tpu_custom_call.1} parent=1 // pred_region
      _
    $region13: #{tpu_custom_call.1} parent=1 // pred_fallthru
      _
    // Predicated region
    $region14: #{tpu_custom_call.1} parent=1 // pred_check
      _
    $region15: #{tpu_custom_call.1} parent=1 // pred_check_branch
      %22 = sbr.rel (0) target = $region17
    $region16: #{tpu_custom_call.1} parent=1 // pred_region
      %s24 = ssub.s32 2048, 2048
      %25 = vsyncadd [#allocation3], %s24
      %s26 = sshll.u32 [#allocation2], 4
      %s27 = int_to_ptr.vmem [resolvable:$true] %s26
      %32 = dma.hbm_to_vmem [thread:$0]  %s3, 2048, %s27, [#allocation3], 128, 128, 8
    $region17: #{tpu_custom_call.1} parent=1 // pred_fallthru
      _
    // Predicated region
    $region18: #{tpu_custom_call.1} parent=1 // pred_check
      _
    $region19: #{tpu_custom_call.1} parent=1 // pred_check_branch
      %34 = sbr.rel (0) target = $region21
    $region20: #{tpu_custom_call.1} parent=1 // pred_region
      _
    $region21: #{tpu_custom_call.1} parent=1 // pred_fallthru
      _
    // Predicated region
    $region22: #{tpu_custom_call.1} parent=1 // pred_check
      _
    $region23: #{tpu_custom_call.1} parent=1 // pred_check_branch
      %36 = sbr.rel (0) target = $region25
    $region24: #{tpu_custom_call.1} parent=1 // pred_region
      %s38 = ssub.s32 2048, 2048
      %39 = vsyncadd [#allocation6], %s38
      %s40 = sshll.u32 [#allocation5], 4
      %s41 = int_to_ptr.vmem [resolvable:$true] %s40
      %46 = dma.hbm_to_vmem [thread:$0]  %s5, 2048, %s41, [#allocation6], 128, 128, 8
    $region25: #{tpu_custom_call.1} parent=1 // pred_fallthru
      _
    // Predicated region
    $region26: #{tpu_custom_call.1} parent=1 // pred_check
      _
    $region27: #{tpu_custom_call.1} parent=1 // pred_check_branch
      %48 = sbr.rel (0) target = $region29
    $region28: #{tpu_custom_call.1} parent=1 // pred_region
      _
    $region29: #{tpu_custom_call.1} parent=1 // pred_fallthru
      _
    // Predicated region
    $region30: #{tpu_custom_call.1} parent=1 // pred_check
      _
    $region31: #{tpu_custom_call.1} parent=1 // pred_check_branch
      %50 = sbr.rel (0) target = $region33
    $region32: #{tpu_custom_call.1} parent=1 // pred_region
      %51 = dma.done [#allocation3], 2048
    $region33: #{tpu_custom_call.1} parent=1 // pred_fallthru
      _
    // Predicated region
    $region34: #{tpu_custom_call.1} parent=1 // pred_check
      _
    $region35: #{tpu_custom_call.1} parent=1 // pred_check_branch
      %53 = sbr.rel (0) target = $region37
    $region36: #{tpu_custom_call.1} parent=1 // pred_region
      %54 = dma.done [#allocation6], 2048
    $region37: #{tpu_custom_call.1} parent=1 // pred_fallthru
      _
    %v55 = vld [vmem:[%s0] sm:$0xff]
    %v56 = vld [vmem:[%s0 + $0x8] sm:$0xff]
    %v57 = vld [vmem:[%s0 + $0x10] sm:$0xff]
    %v58 = vld [vmem:[%s0 + $0x18] sm:$0xff]
    %v59 = vld [vmem:[%s1] sm:$0xf]
    %v60 = vld [vmem:[%s2] sm:$0x1]
    %v62 = vlaneseq
    %v63 = vshrl.u32 %v62, 7
    %v64 = vsub.s32 0, %v63
    %v65 = vrot.slane %v60, %v64
    %vm67 = vcmask 31744
    %v69 = vsel %vm67, %v55, 0
    %v72 = vsel %vm67, %v56, 0
    %v75 = vsel %vm67, %v57, 0
    %v78 = vsel %vm67, %v58, 0
    %vm80 = vcmask 1043456
    %v82 = vsel %vm80, %v59, 0
    %84 = vmatprep.subr.mxu0 0.0
    %85 = vmatpush1.msra.mxu0 %v82
    %86 = vmatprep.subr.mxu0 0.0
    %87 = vmatpush1.msra.mxu0 0.0
    %88 = vmatprep.subr.mxu0 0.0
    %89 = vmatpush1.msra.mxu0 0.0
    %90 = vmatprep.subr.mxu0 0.0
    %91 = vmatpush1.msra.mxu0 0.0
    %92 = vmatprep.subr.mxu0 0.0
    %93 = vmatpush1.msra.mxu0 0.0
    %94 = vmatprep.subr.mxu0 0.0
    %95 = vmatpush1.msra.mxu0 0.0
    %96 = vmatprep.subr.mxu0 0.0
    %97 = vmatpush1.msra.mxu0 0.0
    %98 = vmatprep.subr.mxu0 0.0
    %99 = vmatpush1.msra.mxu0 0.0
    %100 = vmatprep.subr.mxu0 0.0
    %101 = vmatpush1.msra.mxu0 0.0
    %102 = vmatprep.subr.mxu0 0.0
    %103 = vmatpush1.msra.mxu0 0.0
    %104 = vmatprep.subr.mxu0 0.0
    %105 = vmatpush1.msra.mxu0 0.0
    %106 = vmatprep.subr.mxu0 0.0
    %107 = vmatpush1.msra.mxu0 0.0
    %108 = vmatprep.subr.mxu0 0.0
    %109 = vmatpush1.msra.mxu0 0.0
    %110 = vmatprep.subr.mxu0 0.0
    %111 = vmatpush1.msra.mxu0 0.0
    %112 = vmatprep.subr.mxu0 0.0
    %113 = vmatpush1.msra.mxu0 0.0
    %114 = vmatprep.subr.mxu0 0.0
    %115 = vmatpush1.msra.mxu0 0.0
    %116 = vmatprep.subr.mxu0 0.0
    %117 = vmatpush1.msra.mxu0 0.0
    %118 = vmatprep.subr.mxu0 0.0
    %119 = vmatpush1.msra.mxu0 0.0
    %120 = vmatprep.subr.mxu0 0.0
    %121 = vmatpush1.msra.mxu0 0.0
    %122 = vmatprep.subr.mxu0 0.0
    %123 = vmatpush1.msra.mxu0 0.0
    %124 = vmatprep.subr.mxu0 0.0
    %125 = vmatpush1.msra.mxu0 0.0
    %126 = vmatprep.subr.mxu0 0.0
    %127 = vmatpush1.msra.mxu0 0.0
    %128 = vmatprep.subr.mxu0 0.0
    %129 = vmatpush1.msra.mxu0 0.0
    %130 = vmatprep.subr.mxu0 0.0
    %131 = vmatpush1.msra.mxu0 0.0
    %132 = vmatprep.subr.mxu0 0.0
    %133 = vmatpush1.msra.mxu0 0.0
    %134 = vmatprep.subr.mxu0 0.0
    %135 = vmatpush1.msra.mxu0 0.0
    %136 = vmatprep.subr.mxu0 0.0
    %137 = vmatpush1.msra.mxu0 0.0
    %138 = vmatprep.subr.mxu0 0.0
    %139 = vmatpush1.msra.mxu0 0.0
    %140 = vmatprep.subr.mxu0 0.0
    %141 = vmatpush1.msra.mxu0 0.0
    %142 = vmatprep.subr.mxu0 0.0
    %143 = vmatpush1.msra.mxu0 0.0
    %144 = vmatprep.subr.mxu0 0.0
    %145 = vmatpush1.msra.mxu0 0.0
    %146 = vmatprep.subr.mxu0 0.0
    %147 = vmatpush1.msra.mxu0 0.0
    %148 = vmatprep.mubr.f32.mxu0 0.0
    %149 = vmatmul.mubr.f32.gmra.mrb[0].mxu0 %v69
    %v150 = vpop.f32.mrb[0].mxu0
    %v151 = vadd.f32 %v65, %v150
    %v152 = vpop.f32.mrb[0].mxu0
    %153 = vmatprep.mubr.f32.mxu0 0.0
    %154 = vmatmul.mubr.f32.gmra.mrb[0].mxu0 %v72
    %v155 = vpop.f32.mrb[0].mxu0
    %v156 = vadd.f32 %v65, %v155
    %v157 = vpop.f32.mrb[0].mxu0
    %158 = vmatprep.mubr.f32.mxu0 0.0
    %159 = vmatmul.mubr.f32.gmra.mrb[0].mxu0 %v75
    %v160 = vpop.f32.mrb[0].mxu0
    %v161 = vadd.f32 %v65, %v160
    %v162 = vpop.f32.mrb[0].mxu0
    %163 = vmatprep.mubr.f32.mxu0 0.0
    %164 = vmatmul.mubr.f32.gmra.mrb[0].mxu0 %v78
    %v165 = vpop.f32.mrb[0].mxu0
    %v166 = vadd.f32 %v65, %v165
    %v167 = vpop.f32.mrb[0].mxu0
    %168 = vdwg.mxu0
    %v169 = vmax.f32 %v151, 0.0
    %v170 = vmax.f32 %v156, 0.0
    %v171 = vmax.f32 %v161, 0.0
    %v172 = vmax.f32 %v166, 0.0
    %v173 = vld [vmem:[#allocation2] sm:$0xff]
    %v174 = vld [vmem:[#allocation2 + $0x8] sm:$0xff]
    %v175 = vld [vmem:[#allocation2 + $0x10] sm:$0xff]
    %v176 = vld [vmem:[#allocation2 + $0x18] sm:$0xff]
    %v177 = vld [vmem:[#allocation2 + $0x20] sm:$0xff]
    %v178 = vld [vmem:[#allocation2 + $0x28] sm:$0xff]
    %v179 = vld [vmem:[#allocation2 + $0x30] sm:$0xff]
    %v180 = vld [vmem:[#allocation2 + $0x38] sm:$0xff]
    %v181 = vld [vmem:[#allocation2 + $0x40] sm:$0xff]
    %v182 = vld [vmem:[#allocation2 + $0x48] sm:$0xff]
    %v183 = vld [vmem:[#allocation2 + $0x50] sm:$0xff]
    %v184 = vld [vmem:[#allocation2 + $0x58] sm:$0xff]
    %v185 = vld [vmem:[#allocation2 + $0x60] sm:$0xff]
    %v186 = vld [vmem:[#allocation2 + $0x68] sm:$0xff]
    %v187 = vld [vmem:[#allocation2 + $0x70] sm:$0xff]
    %v188 = vld [vmem:[#allocation2 + $0x78] sm:$0xff]
    %v189 = vld [vmem:[%s4] sm:$0x1]
    %v191 = vlaneseq
    %v192 = vshrl.u32 %v191, 7
    %v193 = vsub.s32 0, %v192
    %v194 = vrot.slane %v189, %v193
    %196 = vmatprep.subr.mxu0 0.0
    %197 = vmatpush1.msra.mxu0 %v173
    %198 = vmatprep.subr.mxu0 0.0
    %199 = vmatpush1.msra.mxu0 %v174
    %200 = vmatprep.subr.mxu0 0.0
    %201 = vmatpush1.msra.mxu0 %v175
    %202 = vmatprep.subr.mxu0 0.0
    %203 = vmatpush1.msra.mxu0 %v176
    %204 = vmatprep.subr.mxu0 0.0
    %205 = vmatpush1.msra.mxu0 %v177
    %206 = vmatprep.subr.mxu0 0.0
    %207 = vmatpush1.msra.mxu0 %v178
    %208 = vmatprep.subr.mxu0 0.0
    %209 = vmatpush1.msra.mxu0 %v179
    %210 = vmatprep.subr.mxu0 0.0
    %211 = vmatpush1.msra.mxu0 %v180
    %212 = vmatprep.subr.mxu0 0.0
    %213 = vmatpush1.msra.mxu0 %v181
    %214 = vmatprep.subr.mxu0 0.0
    %215 = vmatpush1.msra.mxu0 %v182
    %216 = vmatprep.subr.mxu0 0.0
    %217 = vmatpush1.msra.mxu0 %v183
    %218 = vmatprep.subr.mxu0 0.0
    %219 = vmatpush1.msra.mxu0 %v184
    %220 = vmatprep.subr.mxu0 0.0
    %221 = vmatpush1.msra.mxu0 %v185
    %222 = vmatprep.subr.mxu0 0.0
    %223 = vmatpush1.msra.mxu0 %v186
    %224 = vmatprep.subr.mxu0 0.0
    %225 = vmatpush1.msra.mxu0 %v187
    %226 = vmatprep.subr.mxu0 0.0
    %227 = vmatpush1.msra.mxu0 %v188
    %228 = vmatprep.subr.mxu0 0.0
    %229 = vmatpush1.msra.mxu0 0.0
    %230 = vmatprep.subr.mxu0 0.0
    %231 = vmatpush1.msra.mxu0 0.0
    %232 = vmatprep.subr.mxu0 0.0
    %233 = vmatpush1.msra.mxu0 0.0
    %234 = vmatprep.subr.mxu0 0.0
    %235 = vmatpush1.msra.mxu0 0.0
    %236 = vmatprep.subr.mxu0 0.0
    %237 = vmatpush1.msra.mxu0 0.0
    %238 = vmatprep.subr.mxu0 0.0
    %239 = vmatpush1.msra.mxu0 0.0
    %240 = vmatprep.subr.mxu0 0.0
    %241 = vmatpush1.msra.mxu0 0.0
    %242 = vmatprep.subr.mxu0 0.0
    %243 = vmatpush1.msra.mxu0 0.0
    %244 = vmatprep.subr.mxu0 0.0
    %245 = vmatpush1.msra.mxu0 0.0
    %246 = vmatprep.subr.mxu0 0.0
    %247 = vmatpush1.msra.mxu0 0.0
    %248 = vmatprep.subr.mxu0 0.0
    %249 = vmatpush1.msra.mxu0 0.0
    %250 = vmatprep.subr.mxu0 0.0
    %251 = vmatpush1.msra.mxu0 0.0
    %252 = vmatprep.subr.mxu0 0.0
    %253 = vmatpush1.msra.mxu0 0.0
    %254 = vmatprep.subr.mxu0 0.0
    %255 = vmatpush1.msra.mxu0 0.0
    %256 = vmatprep.subr.mxu0 0.0
    %257 = vmatpush1.msra.mxu0 0.0
    %258 = vmatprep.subr.mxu0 0.0
    %259 = vmatpush1.msra.mxu0 0.0
    %260 = vmatprep.mubr.f32.mxu0 0.0
    %261 = vmatmul.mubr.f32.gmra.mrb[0].mxu0 %v169
    %v262 = vpop.f32.mrb[0].mxu0
    %v263 = vadd.f32 %v194, %v262
    %v264 = vpop.f32.mrb[0].mxu0
    %265 = vmatprep.mubr.f32.mxu0 0.0
    %266 = vmatmul.mubr.f32.gmra.mrb[0].mxu0 %v170
    %v267 = vpop.f32.mrb[0].mxu0
    %v268 = vadd.f32 %v194, %v267
    %v269 = vpop.f32.mrb[0].mxu0
    %270 = vmatprep.mubr.f32.mxu0 0.0
    %271 = vmatmul.mubr.f32.gmra.mrb[0].mxu0 %v171
    %v272 = vpop.f32.mrb[0].mxu0
    %v273 = vadd.f32 %v194, %v272
    %v274 = vpop.f32.mrb[0].mxu0
    %275 = vmatprep.mubr.f32.mxu0 0.0
    %276 = vmatmul.mubr.f32.gmra.mrb[0].mxu0 %v172
    %v277 = vpop.f32.mrb[0].mxu0
    %v278 = vadd.f32 %v194, %v277
    %v279 = vpop.f32.mrb[0].mxu0
    %280 = vdwg.mxu0
    %v281 = vmax.f32 %v263, 0.0
    %v282 = vmax.f32 %v268, 0.0
    %v283 = vmax.f32 %v273, 0.0
    %v284 = vmax.f32 %v278, 0.0
    %v285 = vld [vmem:[#allocation5] sm:$0xff]
    %v286 = vld [vmem:[#allocation5 + $0x8] sm:$0xff]
    %v287 = vld [vmem:[#allocation5 + $0x10] sm:$0xff]
    %v288 = vld [vmem:[#allocation5 + $0x18] sm:$0xff]
    %v289 = vld [vmem:[#allocation5 + $0x20] sm:$0xff]
    %v290 = vld [vmem:[#allocation5 + $0x28] sm:$0xff]
    %v291 = vld [vmem:[#allocation5 + $0x30] sm:$0xff]
    %v292 = vld [vmem:[#allocation5 + $0x38] sm:$0xff]
    %v293 = vld [vmem:[#allocation5 + $0x40] sm:$0xff]
    %v294 = vld [vmem:[#allocation5 + $0x48] sm:$0xff]
    %v295 = vld [vmem:[#allocation5 + $0x50] sm:$0xff]
    %v296 = vld [vmem:[#allocation5 + $0x58] sm:$0xff]
    %v297 = vld [vmem:[#allocation5 + $0x60] sm:$0xff]
    %v298 = vld [vmem:[#allocation5 + $0x68] sm:$0xff]
    %v299 = vld [vmem:[#allocation5 + $0x70] sm:$0xff]
    %v300 = vld [vmem:[#allocation5 + $0x78] sm:$0xff]
    %v301 = vld [vmem:[%s6] sm:$0x1]
    %v303 = vlaneseq
    %v304 = vshrl.u32 %v303, 7
    %v305 = vsub.s32 0, %v304
    %v306 = vrot.slane %v301, %v305
    %308 = vmatprep.subr.mxu0 0.0
    %309 = vmatpush1.msra.mxu0 %v285
    %310 = vmatprep.subr.mxu0 0.0
    %311 = vmatpush1.msra.mxu0 %v286
    %312 = vmatprep.subr.mxu0 0.0
    %313 = vmatpush1.msra.mxu0 %v287
    %314 = vmatprep.subr.mxu0 0.0
    %315 = vmatpush1.msra.mxu0 %v288
    %316 = vmatprep.subr.mxu0 0.0
    %317 = vmatpush1.msra.mxu0 %v289
    %318 = vmatprep.subr.mxu0 0.0
    %319 = vmatpush1.msra.mxu0 %v290
    %320 = vmatprep.subr.mxu0 0.0
    %321 = vmatpush1.msra.mxu0 %v291
    %322 = vmatprep.subr.mxu0 0.0
    %323 = vmatpush1.msra.mxu0 %v292
    %324 = vmatprep.subr.mxu0 0.0
    %325 = vmatpush1.msra.mxu0 %v293
    %326 = vmatprep.subr.mxu0 0.0
    %327 = vmatpush1.msra.mxu0 %v294
    %328 = vmatprep.subr.mxu0 0.0
    %329 = vmatpush1.msra.mxu0 %v295
    %330 = vmatprep.subr.mxu0 0.0
    %331 = vmatpush1.msra.mxu0 %v296
    %332 = vmatprep.subr.mxu0 0.0
    %333 = vmatpush1.msra.mxu0 %v297
    %334 = vmatprep.subr.mxu0 0.0
    %335 = vmatpush1.msra.mxu0 %v298
    %336 = vmatprep.subr.mxu0 0.0
    %337 = vmatpush1.msra.mxu0 %v299
    %338 = vmatprep.subr.mxu0 0.0
    %339 = vmatpush1.msra.mxu0 %v300
    %340 = vmatprep.subr.mxu0 0.0
    %341 = vmatpush1.msra.mxu0 0.0
    %342 = vmatprep.subr.mxu0 0.0
    %343 = vmatpush1.msra.mxu0 0.0
    %344 = vmatprep.subr.mxu0 0.0
    %345 = vmatpush1.msra.mxu0 0.0
    %346 = vmatprep.subr.mxu0 0.0
    %347 = vmatpush1.msra.mxu0 0.0
    %348 = vmatprep.subr.mxu0 0.0
    %349 = vmatpush1.msra.mxu0 0.0
    %350 = vmatprep.subr.mxu0 0.0
    %351 = vmatpush1.msra.mxu0 0.0
    %352 = vmatprep.subr.mxu0 0.0
    %353 = vmatpush1.msra.mxu0 0.0
    %354 = vmatprep.subr.mxu0 0.0
    %355 = vmatpush1.msra.mxu0 0.0
    %356 = vmatprep.subr.mxu0 0.0
    %357 = vmatpush1.msra.mxu0 0.0
    %358 = vmatprep.subr.mxu0 0.0
    %359 = vmatpush1.msra.mxu0 0.0
    %360 = vmatprep.subr.mxu0 0.0
    %361 = vmatpush1.msra.mxu0 0.0
    %362 = vmatprep.subr.mxu0 0.0
    %363 = vmatpush1.msra.mxu0 0.0
    %364 = vmatprep.subr.mxu0 0.0
    %365 = vmatpush1.msra.mxu0 0.0
    %366 = vmatprep.subr.mxu0 0.0
    %367 = vmatpush1.msra.mxu0 0.0
    %368 = vmatprep.subr.mxu0 0.0
    %369 = vmatpush1.msra.mxu0 0.0
    %370 = vmatprep.subr.mxu0 0.0
    %371 = vmatpush1.msra.mxu0 0.0
    %372 = vmatprep.mubr.f32.mxu0 0.0
    %373 = vmatmul.mubr.f32.gmra.mrb[0].mxu0 %v281
    %v374 = vpop.f32.mrb[0].mxu0
    %v375 = vadd.f32 %v306, %v374
    %v376 = vpop.f32.mrb[0].mxu0
    %377 = vmatprep.mubr.f32.mxu0 0.0
    %378 = vmatmul.mubr.f32.gmra.mrb[0].mxu0 %v282
    %v379 = vpop.f32.mrb[0].mxu0
    %v380 = vadd.f32 %v306, %v379
    %v381 = vpop.f32.mrb[0].mxu0
    %382 = vmatprep.mubr.f32.mxu0 0.0
    %383 = vmatmul.mubr.f32.gmra.mrb[0].mxu0 %v283
    %v384 = vpop.f32.mrb[0].mxu0
    %v385 = vadd.f32 %v306, %v384
    %v386 = vpop.f32.mrb[0].mxu0
    %387 = vmatprep.mubr.f32.mxu0 0.0
    %388 = vmatmul.mubr.f32.gmra.mrb[0].mxu0 %v284
    %v389 = vpop.f32.mrb[0].mxu0
    %v390 = vadd.f32 %v306, %v389
    %v391 = vpop.f32.mrb[0].mxu0
    %392 = vdwg.mxu0
    %393 = vst [vmem:[#allocation7] sm:$0xff] %v375
    %394 = vst [vmem:[#allocation7 + $0x8] sm:$0xff] %v380
    %395 = vst [vmem:[#allocation7 + $0x10] sm:$0xff] %v385
    %396 = vst [vmem:[#allocation7 + $0x18] sm:$0xff] %v390
    // Predicated region
    $region38: #{tpu_custom_call.1} parent=1 // pred_check
      _
    $region39: #{tpu_custom_call.1} parent=1 // pred_check_branch
      %398 = sbr.rel (0) target = $region41
    $region40: #{tpu_custom_call.1} parent=1 // pred_region
      %s400 = ssub.s32 512, 512
      %401 = vsyncadd [#allocation4], %s400
      %s402 = sshll.u32 [#allocation7], 4
      %s403 = int_to_ptr.vmem [resolvable:$true] %s402
      %408 = dma.vmem_to_hbm [thread:$0]  %s403, 512, %s7, [#allocation4], 128, 128, 8
    $region41: #{tpu_custom_call.1} parent=1 // pred_fallthru
      _
    // Predicated region
    $region42: #{tpu_custom_call.1} parent=1 // pred_check
      _
    $region43: #{tpu_custom_call.1} parent=1 // pred_check_branch
      %410 = sbr.rel (0) target = $region45
    $region44: #{tpu_custom_call.1} parent=1 // pred_region
      %411 = dma.done [#allocation4], 512
    $region45: #{tpu_custom_call.1} parent=1 // pred_fallthru
      _
    %412 = vsyncpa [#allocation3], 1
    %413 = vsyncpa [#allocation6], 1
    %414 = vsyncpa [#allocation4], 1

</llo_original>
